<compile_context>
chip_gen: v5e
topology: v5e:2x2
jax: 0.10.0
libtpu: 0.0.40
codegen_flags: <defaults>
</compile_context>

<pallas_src>
import jax
import jax.numpy as jnp
import numpy as np
from jax.experimental import pallas as pl
from jax.experimental.pallas import tpu as pltpu

_LANE = 128
_NEG = -1.0e30  # pad-class bias: exp(_NEG - m) underflows to 0 exactly


def _round_up(x, m):
    return (x + m - 1) // m * m


def _pad2(v, r, c, fill=0.0):
    out = jnp.full((r, c), fill, jnp.float32)
    return out.at[:v.shape[0], :v.shape[1]].set(v)


# --------------------------- shared kernel pieces ----------------------------

def _conv_mlp(a, x_full, x_self, eps, w0, b0, w1, b1):
    """((1+eps)*x_self + a @ x_full) -> Linear -> ReLU -> Linear (BN folded)."""
    f32 = jnp.float32
    # bf16 x bf16 -> f32 accumulation on the MXU (the dominant matmul).
    agg = jnp.dot(a, x_full, preferred_element_type=f32)
    z = agg + (1.0 + eps) * x_self.astype(f32)
    z = jnp.maximum(jnp.dot(z, w0, preferred_element_type=f32) + b0, 0.0)
    return jnp.dot(z, w1, preferred_element_type=f32) + b1


def _log_softmax(z):
    m = jnp.max(z, axis=-1, keepdims=True)
    zc = z - m
    return zc - jnp.log(jnp.sum(jnp.exp(zc), axis=-1, keepdims=True))


# ------------------------------ tiled kernels ---------------------------------

def _gin_conv_relu_kernel(x_ref, xt_ref, a_ref, eps_ref, w0_ref, b0_ref,
                          w1_ref, b1_ref, o_ref):
    """One GINConv + outer ReLU for one row tile; h emitted in bf16."""
    z = _conv_mlp(a_ref[...], x_ref[...], xt_ref[...], eps_ref[0],
                  w0_ref[...], b0_ref[...], w1_ref[...], b1_ref[...])
    o_ref[...] = jnp.maximum(z, 0.0).astype(o_ref.dtype)
    # F.dropout(p=0.0) == identity


def _gin_conv_lsm_kernel(h_ref, ht_ref, a_ref, eps_ref, w0_ref, b0_ref,
                         w1_ref, b1_ref, o_ref):
    """Last GINConv + log_softmax for one row tile (pad classes biased -1e30)."""
    z = _conv_mlp(a_ref[...], h_ref[...], ht_ref[...], eps_ref[0],
                  w0_ref[...], b0_ref[...], w1_ref[...], b1_ref[...])
    o_ref[...] = _log_softmax(z).astype(o_ref.dtype)


# ------------------------------ fused kernel ----------------------------------

def _gin_fused_kernel(x_ref, a_ref, eps_ref, w10_ref, b10_ref, w11_ref, b11_ref,
                      w20_ref, b20_ref, w21_ref, b21_ref, o_ref):
    """Both GINConvs in one program; A is read from HBM exactly once."""
    a = a_ref[...]
    x = x_ref[...]
    h = jnp.maximum(
        _conv_mlp(a, x, x, eps_ref[0], w10_ref[...], b10_ref[...],
                  w11_ref[...], b11_ref[...]), 0.0)
    hb = h.astype(jnp.bfloat16)            # same quantization as the tiled path
    logits = _conv_mlp(a, hb, hb, eps_ref[1], w20_ref[...], b20_ref[...],
                       w21_ref[...], b21_ref[...])
    o_ref[...] = _log_softmax(logits).astype(o_ref.dtype)


# ------------------------------ call builders ---------------------------------

def _invariant_spec(shape, single_buffer):
    """Full-array, grid-invariant operand; single-buffered when supported."""
    if single_buffer and hasattr(pl, "Buffered"):
        return pl.BlockSpec(shape, lambda i: (0, 0), pipeline_mode=pl.Buffered(1))
    return pl.BlockSpec(shape, lambda i: (0, 0))


def _make_conv_call(kernel, n_pad, tm, f_in, f_mid, f_out, out_dtype,
                    vmem_limit, single_buffer):
    inv = lambda shape: _invariant_spec(shape, single_buffer)
    in_specs = [
        inv((n_pad, f_in)),                                   # resident X / H (bf16)
        pl.BlockSpec((tm, f_in), lambda i: (i, 0)),           # self-term row tile
        pl.BlockSpec((tm, n_pad), lambda i: (i, 0)),          # adjacency row tile
        pl.BlockSpec(memory_space=pltpu.MemorySpace.SMEM),    # eps scalar
        inv((f_in, f_mid)), inv((1, f_mid)),                  # Linear 0
        inv((f_mid, f_out)), inv((1, f_out)),                 # Linear 1 (BN folded)
    ]
    return pl.pallas_call(
        kernel,
        out_shape=jax.ShapeDtypeStruct((n_pad, f_out), out_dtype),
        grid=(n_pad // tm,),
        in_specs=in_specs,
        out_specs=pl.BlockSpec((tm, f_out), lambda i: (i, 0)),
        compiler_params=pltpu.CompilerParams(
            dimension_semantics=("parallel",),
            vmem_limit_bytes=vmem_limit,
        ),
    )


def _tiled_forward(x_p, a_p, prep, n_pad, tm, fp, hp, cp, vmem_limit,
                   single_buffer):
    conv0 = _make_conv_call(_gin_conv_relu_kernel, n_pad, tm, fp, hp, hp,
                            jnp.bfloat16, vmem_limit, single_buffer)
    h = conv0(x_p, x_p, a_p, prep["eps0"], prep["w10"], prep["b10"],
              prep["w11"], prep["b11"])
    conv1 = _make_conv_call(_gin_conv_lsm_kernel, n_pad, tm, hp, hp, cp,
                            jnp.float32, vmem_limit, single_buffer)
    return conv1(h, h, a_p, prep["eps1"], prep["w20"], prep["b20"],
                 prep["w21"], prep["b21"])


def _fused_forward(x_p, a_p, prep, n8, cp, vmem_limit):
    vmem = pl.BlockSpec(memory_space=pltpu.MemorySpace.VMEM)
    smem = pl.BlockSpec(memory_space=pltpu.MemorySpace.SMEM)
    call = pl.pallas_call(
        _gin_fused_kernel,
        out_shape=jax.ShapeDtypeStruct((n8, cp), jnp.float32),
        in_specs=[vmem, vmem, smem] + [vmem] * 8,
        out_specs=vmem,
        compiler_params=pltpu.CompilerParams(vmem_limit_bytes=vmem_limit),
    )
    eps01 = jnp.concatenate([prep["eps0"], prep["eps1"]])
    return call(x_p, a_p, eps01,
                prep["w10"], prep["b10"], prep["w11"], prep["b11"],
                prep["w20"], prep["b20"], prep["w21"], prep["b21"])


# ------------------------- generation-aware tiling -----------------------------

def _vmem_capacity_bytes():
    try:
        return int(pltpu.get_tpu_info().vmem_capacity_bytes)
    except Exception:
        return 64 * (1 << 20)      # conservative: assume v7x (64 MiB per TC)


def _pick_tiling(n8, fp, hp, cp):
    cap = _vmem_capacity_bytes()
    if cap >= 96 * (1 << 20):      # v5e / v6e: 128 MiB physical VMEM
        return 512, 64 * (1 << 20)
    # v7x: 64 MiB per TC.  Derive the row tile from the VMEM budget.
    vmem_limit = 48 * (1 << 20)
    n_cols = _round_up(n8, 256)
    resident = (n_cols * max(fp, hp) * 2
                + (fp * hp + 2 * hp * hp + hp * cp + 3 * hp + cp) * 4)
    budget = max(vmem_limit - resident - (4 << 20), 2 << 20)
    per_row = 4 * n_cols + 4 * max(fp, hp) + 8 * max(hp, cp) + 12 * hp
    tm = max(8, min(256, (budget // per_row) // 8 * 8))
    return tm, vmem_limit


def _fused_fits(n8, fp, hp, cp, vmem_limit):
    operands = (n8 * n8 * 2 + n8 * fp * 2
                + (fp * hp + 2 * hp * hp + hp * cp + 3 * hp + cp) * 4
                + n8 * cp * 4)
    temps = 4 * n8 * hp * 4 + 2 * n8 * max(fp, cp) * 4
    return operands + temps <= int(0.7 * vmem_limit)


# --------------------------------- wrapper -------------------------------------

def gin_forward(x, adj, prep, *, num_classes, force_tiled=False):
    """x: (N, F) node features, adj: (N, N) dense adjacency (A[dst, src])."""
    n, f = x.shape
    fp, hp, cp = prep["dims"]
    n8 = _round_up(max(n, 8), 8)
    tm_target, vmem_limit = _pick_tiling(n8, fp, hp, cp)

    if (not force_tiled) and _fused_fits(n8, fp, hp, cp, vmem_limit):
        # Everything VMEM-resident: read A once, keep h on chip.
        x_p = _pad2(x, n8, fp).astype(jnp.bfloat16)
        a_p = _pad2(adj, n8, n8).astype(jnp.bfloat16)
        out = _fused_forward(x_p, a_p, prep, n8, cp, vmem_limit)
        return out[:n, :num_classes]

    # Row-tiled path: one pallas_call per GINConv (conv1 needs the full h).
    tm = min(tm_target, n8)
    if n8 > 8 and tm >= n8:
        tm = _round_up((n8 + 1) // 2, 8)   # >=2 grid steps -> both TCs busy on v7x
    n_pad = _round_up(n8, tm)
    x_p = _pad2(x, n_pad, fp).astype(jnp.bfloat16)
    # bf16 adjacency: small integer edge multiplicities are exactly representable.
    a_p = _pad2(adj, n_pad, n_pad).astype(jnp.bfloat16)
    try:
        out = _tiled_forward(x_p, a_p, prep, n_pad, tm, fp, hp, cp,
                             vmem_limit, single_buffer=True)
    except Exception:
        # Fallback if this JAX build rejects pipeline_mode=pl.Buffered(1).
        out = _tiled_forward(x_p, a_p, prep, n_pad, tm, fp, hp, cp,
                             vmem_limit, single_buffer=False)
    return out[:n, :num_classes]


# ----------------------- parameter construction (glue) -------------------------

def _linear_init(key, fan_in, fan_out):
    # PyTorch nn.Linear default: U(-1/sqrt(fan_in), 1/sqrt(fan_in))
    kw, kb = jax.random.split(key)
    bound = 1.0 / np.sqrt(fan_in)
    w = jax.random.uniform(kw, (fan_in, fan_out), jnp.float32, -bound, bound)
    b = jax.random.uniform(kb, (1, fan_out), jnp.float32, -bound, bound)
    return w, b


def make_params(key, num_features, hidden, num_classes):
    k0, k1, k2, k3 = jax.random.split(key, 4)
    w10, b10 = _linear_init(k0, num_features, hidden)
    w11, b11 = _linear_init(k1, hidden, hidden)
    w20, b20 = _linear_init(k2, hidden, hidden)
    w21, b21 = _linear_init(k3, hidden, num_classes)
    # BatchNorm1d at init (inference): gamma=1, beta=0, mean=0, var=1, eps=1e-5
    bn_eps = 1e-5
    s = jnp.full((1, hidden), 1.0 / np.sqrt(1.0 + bn_eps), jnp.float32)
    t = jnp.zeros((1, hidden), jnp.float32)
    zero = jnp.zeros((1, 1), jnp.float32)   # GINConv eps init = 0.0
    return dict(
        eps0=zero, w10=w10, b10=b10, s0=s, t0=t, w11=w11, b11=b11,
        eps1=zero, w20=w20, b20=b20, s1=s, t1=t, w21=w21, b21=b21,
    )


def prepare_params(p, num_features, hidden, num_classes):
    """Host-side: fold BatchNorm into the second Linear, lane-pad everything."""
    fp = _round_up(num_features, _LANE)
    hp = _round_up(hidden, _LANE)
    cp = _round_up(num_classes, _LANE)

    # (h*s + t) @ w + b  ==  h @ (s.T * w) + (t @ w + b)   (exact fold)
    w11f = p["w11"] * p["s0"].reshape(-1, 1)
    b11f = p["b11"] + p["t0"] @ p["w11"]
    w21f = p["w21"] * p["s1"].reshape(-1, 1)
    b21f = p["b21"] + p["t1"] @ p["w21"]

    return dict(
        eps0=p["eps0"].reshape(1).astype(jnp.float32),
        eps1=p["eps1"].reshape(1).astype(jnp.float32),
        w10=_pad2(p["w10"], fp, hp), b10=_pad2(p["b10"], 1, hp),
        w11=_pad2(w11f, hp, hp),     b11=_pad2(b11f, 1, hp),
        w20=_pad2(p["w20"], hp, hp), b20=_pad2(p["b20"], 1, hp),
        w21=_pad2(w21f, hp, cp),     b21=_pad2(b21f, 1, cp, fill=_NEG),
        dims=(fp, hp, cp),
    )


# --------------------------------- reference ------------------------------------

def ref_forward(x, adj, p, *, quantize=False):
    """Pure-JAX reference (PyTorch module semantics, unfolded BN).

    quantize=True reproduces the kernel's deliberate bf16 quantization of the
    aggregation operands (A, X, H) so a tight tolerance is meaningful.
    """
    hi = jax.lax.Precision.HIGHEST
    dot = lambda a, b: jnp.dot(a, b, precision=hi)
    q = ((lambda v: v.astype(jnp.bfloat16).astype(jnp.float32)) if quantize
         else (lambda v: v))
    adj_q = q(adj)

    def conv(h, eps, w0, b0, s, t, w1, b1):
        hq = q(h)
        z = dot(adj_q, hq) + (1.0 + eps) * hq
        z = jnp.maximum(dot(z, w0) + b0, 0.0)
        z = z * s + t
        return dot(z, w1) + b1

    h = conv(x, p["eps0"][0, 0], p["w10"], p["b10"], p["s0"], p["t0"],
             p["w11"], p["b11"])
    h = jnp.maximum(h, 0.0)
    logits = conv(h, p["eps1"][0, 0], p["w20"], p["b20"], p["s1"], p["t1"],
                  p["w21"], p["b21"])
    return jax.nn.log_softmax(logits, axis=-1)


if __name__ == "__main__":
    key = jax.random.PRNGKey(0)
    N, F, H, C, E = 64, 16, 32, 8, 256   # nodes, features, hidden, classes, edges

    kx, ks, kd, kp = jax.random.split(key, 4)
    x = jax.random.normal(kx, (N, F), jnp.float32)
    src = jax.random.randint(ks, (E,), 0, N)
    dst = jax.random.randint(kd, (E,), 0, N)
    # edge_index = [src; dst] with PyG source_to_target flow -> A[dst, src] += 1
    adj = jnp.zeros((N, N), jnp.float32).at[dst, src].add(1.0)

    raw = make_params(kp, F, H, C)
    prep = prepare_params(raw, F, H, C)

    ref_exact = np.asarray(ref_forward(x, adj, raw, quantize=False))
    ref_quant = np.asarray(ref_forward(x, adj, raw, quantize=True))

    out_fused = jax.block_until_ready(gin_forward(x, adj, prep, num_classes=C))
    out_tiled = jax.block_until_ready(
        gin_forward(x, adj, prep, num_classes=C, force_tiled=True))

    for out in (out_fused, out_tiled):
        o = np.asarray(out)
        # Tight check vs the quantization-matched reference (same bf16 rounding).
        np.testing.assert_allclose(o, ref_quant, rtol=1e-3, atol=1e-3)
        # Loose check vs the exact f32 module semantics (bf16 aggregation noise).
        np.testing.assert_allclose(o, ref_exact, rtol=5e-2, atol=5e-2)
    print("KERNEL_OK")
</pallas_src>

<mosaic_0001>
module attributes {stable_mosaic.version = 11 : i64} {
  func.func @_gin_fused_kernel(%arg0: memref<64x128xbf16, #tpu.memory_space<vmem>>, %arg1: memref<64x64xbf16, #tpu.memory_space<vmem>>, %arg2: memref<2xf32, #tpu.memory_space<smem>>, %arg3: memref<128x128xf32, #tpu.memory_space<vmem>>, %arg4: memref<1x128xf32, #tpu.memory_space<vmem>>, %arg5: memref<128x128xf32, #tpu.memory_space<vmem>>, %arg6: memref<1x128xf32, #tpu.memory_space<vmem>>, %arg7: memref<128x128xf32, #tpu.memory_space<vmem>>, %arg8: memref<1x128xf32, #tpu.memory_space<vmem>>, %arg9: memref<128x128xf32, #tpu.memory_space<vmem>>, %arg10: memref<1x128xf32, #tpu.memory_space<vmem>>, %arg11: memref<64x128xf32, #tpu.memory_space<vmem>>) attributes {dimension_semantics = [], scalar_prefetch = 0 : i64, scratch_operands = 0 : i64, tpu.core_type = #tpu.core_type<tc>} {
    %c0 = arith.constant 0 : index
    %c0_0 = arith.constant 0 : index
    %0 = vector.load %arg1[%c0, %c0_0] : memref<64x64xbf16, #tpu.memory_space<vmem>>, vector<64x64xbf16>
    %c0_1 = arith.constant 0 : index
    %c0_2 = arith.constant 0 : index
    %1 = vector.load %arg0[%c0_1, %c0_2] : memref<64x128xbf16, #tpu.memory_space<vmem>>, vector<64x128xbf16>
    %c0_3 = arith.constant 0 : index
    %2 = memref.load %arg2[%c0_3] : memref<2xf32, #tpu.memory_space<smem>>
    %c0_4 = arith.constant 0 : index
    %c0_5 = arith.constant 0 : index
    %3 = vector.load %arg3[%c0_4, %c0_5] : memref<128x128xf32, #tpu.memory_space<vmem>>, vector<128x128xf32>
    %c0_6 = arith.constant 0 : index
    %c0_7 = arith.constant 0 : index
    %4 = vector.load %arg4[%c0_6, %c0_7] : memref<1x128xf32, #tpu.memory_space<vmem>>, vector<1x128xf32>
    %c0_8 = arith.constant 0 : index
    %c0_9 = arith.constant 0 : index
    %5 = vector.load %arg5[%c0_8, %c0_9] : memref<128x128xf32, #tpu.memory_space<vmem>>, vector<128x128xf32>
    %c0_10 = arith.constant 0 : index
    %c0_11 = arith.constant 0 : index
    %6 = vector.load %arg6[%c0_10, %c0_11] : memref<1x128xf32, #tpu.memory_space<vmem>>, vector<1x128xf32>
    %cst = arith.constant dense<0.000000e+00> : vector<64x128xf32>
    %7 = tpu.matmul %0, %1, %cst {dimension_numbers = #tpu.dot_dimension_numbers<[1], [0], [0], [1], [0, 0, 1, 1], [], []>} : vector<64x64xbf16>, vector<64x128xbf16>, vector<64x128xf32> -> vector<64x128xf32>
    %cst_12 = arith.constant 1.000000e+00 : f32
    %8 = arith.addf %cst_12, %2 : f32
    %9 = arith.extf %1 : vector<64x128xbf16> to vector<64x128xf32>
    %10 = vector.broadcast %8 : f32 to vector<64x128xf32>
    %11 = arith.mulf %10, %9 : vector<64x128xf32>
    %12 = arith.addf %7, %11 : vector<64x128xf32>
    %cst_13 = arith.constant dense<0.000000e+00> : vector<64x128xf32>
    %13 = tpu.matmul %12, %3, %cst_13 {dimension_numbers = #tpu.dot_dimension_numbers<[1], [0], [0], [1], [0, 0, 1, 1], [], []>} : vector<64x128xf32>, vector<128x128xf32>, vector<64x128xf32> -> vector<64x128xf32>
    %14 = vector.broadcast %4 : vector<1x128xf32> to vector<64x128xf32>
    %15 = arith.addf %13, %14 : vector<64x128xf32>
    %cst_14 = arith.constant 0.000000e+00 : f32
    %16 = vector.broadcast %cst_14 : f32 to vector<64x128xf32>
    %17 = arith.maximumf %15, %16 : vector<64x128xf32>
    %cst_15 = arith.constant dense<0.000000e+00> : vector<64x128xf32>
    %18 = tpu.matmul %17, %5, %cst_15 {dimension_numbers = #tpu.dot_dimension_numbers<[1], [0], [0], [1], [0, 0, 1, 1], [], []>} : vector<64x128xf32>, vector<128x128xf32>, vector<64x128xf32> -> vector<64x128xf32>
    %19 = vector.broadcast %6 : vector<1x128xf32> to vector<64x128xf32>
    %20 = arith.addf %18, %19 : vector<64x128xf32>
    %cst_16 = arith.constant 0.000000e+00 : f32
    %21 = vector.broadcast %cst_16 : f32 to vector<64x128xf32>
    %22 = arith.maximumf %20, %21 : vector<64x128xf32>
    %23 = arith.truncf %22 : vector<64x128xf32> to vector<64x128xbf16>
    %c1 = arith.constant 1 : index
    %24 = memref.load %arg2[%c1] : memref<2xf32, #tpu.memory_space<smem>>
    %c0_17 = arith.constant 0 : index
    %c0_18 = arith.constant 0 : index
    %25 = vector.load %arg7[%c0_17, %c0_18] : memref<128x128xf32, #tpu.memory_space<vmem>>, vector<128x128xf32>
    %c0_19 = arith.constant 0 : index
    %c0_20 = arith.constant 0 : index
    %26 = vector.load %arg8[%c0_19, %c0_20] : memref<1x128xf32, #tpu.memory_space<vmem>>, vector<1x128xf32>
    %c0_21 = arith.constant 0 : index
    %c0_22 = arith.constant 0 : index
    %27 = vector.load %arg9[%c0_21, %c0_22] : memref<128x128xf32, #tpu.memory_space<vmem>>, vector<128x128xf32>
    %c0_23 = arith.constant 0 : index
    %c0_24 = arith.constant 0 : index
    %28 = vector.load %arg10[%c0_23, %c0_24] : memref<1x128xf32, #tpu.memory_space<vmem>>, vector<1x128xf32>
    %cst_25 = arith.constant dense<0.000000e+00> : vector<64x128xf32>
    %29 = tpu.matmul %0, %23, %cst_25 {dimension_numbers = #tpu.dot_dimension_numbers<[1], [0], [0], [1], [0, 0, 1, 1], [], []>} : vector<64x64xbf16>, vector<64x128xbf16>, vector<64x128xf32> -> vector<64x128xf32>
    %cst_26 = arith.constant 1.000000e+00 : f32
    %30 = arith.addf %cst_26, %24 : f32
    %31 = arith.extf %23 : vector<64x128xbf16> to vector<64x128xf32>
    %32 = vector.broadcast %30 : f32 to vector<64x128xf32>
    %33 = arith.mulf %32, %31 : vector<64x128xf32>
    %34 = arith.addf %29, %33 : vector<64x128xf32>
    %cst_27 = arith.constant dense<0.000000e+00> : vector<64x128xf32>
    %35 = tpu.matmul %34, %25, %cst_27 {dimension_numbers = #tpu.dot_dimension_numbers<[1], [0], [0], [1], [0, 0, 1, 1], [], []>} : vector<64x128xf32>, vector<128x128xf32>, vector<64x128xf32> -> vector<64x128xf32>
    %36 = vector.broadcast %26 : vector<1x128xf32> to vector<64x128xf32>
    %37 = arith.addf %35, %36 : vector<64x128xf32>
    %cst_28 = arith.constant 0.000000e+00 : f32
    %38 = vector.broadcast %cst_28 : f32 to vector<64x128xf32>
    %39 = arith.maximumf %37, %38 : vector<64x128xf32>
    %cst_29 = arith.constant dense<0.000000e+00> : vector<64x128xf32>
    %40 = tpu.matmul %39, %27, %cst_29 {dimension_numbers = #tpu.dot_dimension_numbers<[1], [0], [0], [1], [0, 0, 1, 1], [], []>} : vector<64x128xf32>, vector<128x128xf32>, vector<64x128xf32> -> vector<64x128xf32>
    %41 = vector.broadcast %28 : vector<1x128xf32> to vector<64x128xf32>
    %42 = arith.addf %40, %41 : vector<64x128xf32>
    %cst_30 = arith.constant dense<0xFF800000> : vector<64xf32>
    %43 = vector.multi_reduction <maximumf>, %42, %cst_30 [1] : vector<64x128xf32> to vector<64xf32>
    %44 = vector.shape_cast %43 : vector<64xf32> to vector<64x1xf32>
    %45 = vector.broadcast %44 : vector<64x1xf32> to vector<64x128xf32>
    %46 = arith.subf %42, %45 : vector<64x128xf32>
    %47 = math.exp %46 : vector<64x128xf32>
    %cst_31 = arith.constant dense<0.000000e+00> : vector<64xf32>
    %48 = vector.multi_reduction <add>, %47, %cst_31 [1] : vector<64x128xf32> to vector<64xf32>
    %49 = vector.shape_cast %48 : vector<64xf32> to vector<64x1xf32>
    %50 = math.log %49 : vector<64x1xf32>
    %51 = vector.broadcast %50 : vector<64x1xf32> to vector<64x128xf32>
    %52 = arith.subf %46, %51 : vector<64x128xf32>
    %c0_32 = arith.constant 0 : index
    %c0_33 = arith.constant 0 : index
    %53 = vector.load %arg11[%c0_32, %c0_33] : memref<64x128xf32, #tpu.memory_space<vmem>>, vector<64x128xf32>
    tpu.vector_store %arg11[%c0_32, %c0_33], %52 {strides = array<i32>} : memref<64x128xf32, #tpu.memory_space<vmem>>, vector<64x128xf32>,
    return
  }
}

</mosaic_0001>

<llo_original>
// kernel: tpu_custom_call.1
$region0: #{tpu_custom_call.1}
  #allocation0 [shape = 'u32[]', space=smem, size = 0x4, offset = 0x4, fixed_abs, tag = 'smem constant byte address 0x4 - core index']
  #allocation1 [shape = 'u32[72,128]{1,0:T(1,128)}', space=vmem, size = 0x9000, scoped, tag = 'internal scratch']
  %s0 = inlined_call_operand.hbm [shape: bf16[64,128], index: 0, kind: input, shape index: {}]
  %s1 = inlined_call_operand.hbm [shape: bf16[64,64], index: 1, kind: input, shape index: {}]
  %s2 = inlined_call_operand.vmem [shape: f32[2], index: 2, kind: input, shape index: {}]
  %s3 = inlined_call_operand.hbm [shape: f32[128,128], index: 3, kind: input, shape index: {}]
  %s4 = inlined_call_operand.vmem [shape: f32[1,128], index: 4, kind: input, shape index: {}]
  %s5 = inlined_call_operand.hbm [shape: f32[128,128], index: 5, kind: input, shape index: {}]
  %s6 = inlined_call_operand.vmem [shape: f32[1,128], index: 6, kind: input, shape index: {}]
  %s7 = inlined_call_operand.hbm [shape: f32[128,128], index: 7, kind: input, shape index: {}]
  %s8 = inlined_call_operand.vmem [shape: f32[1,128], index: 8, kind: input, shape index: {}]
  %s9 = inlined_call_operand.hbm [shape: f32[128,128], index: 9, kind: input, shape index: {}]
  %s10 = inlined_call_operand.vmem [shape: f32[1,128], index: 10, kind: input, shape index: {}]
  %s11 = inlined_call_operand.hbm [shape: f32[64,128], index: 11, kind: output, shape index: {}]
  %s12 = sld [smem:[#allocation0]]
  $region82: #{tpu_custom_call.1} parent=0
    _
  %s14 = ssub.s32 1, %s12
  %s15 = scalar_select 0, %s14, %s12
  $region1: #{tpu_custom_call.1} parent=0
    #allocation2 [shape = 'u8[16384]{0}', space=vmem, size = 0x4000, scoped, tag = 'input window, operand 0, single buffered']
    #allocation3 [shape = 's32[1]{0}', space=sflag, size = 0x4, scoped, tag = 'scoped memory for tpu_custom_call.1']
    #allocation4 [shape = 's32[1]{0}', space=sflag, size = 0x4, scoped, tag = 'scoped memory for tpu_custom_call.1']
    #allocation5 [shape = 's32[1]{0}', space=sflag, size = 0x4, scoped, tag = 'scoped memory for tpu_custom_call.1']
    #allocation6 [shape = 'u8[16384]{0}', space=vmem, size = 0x4000, scoped, tag = 'input window, operand 1, single buffered']
    #allocation7 [shape = 's32[1]{0}', space=sflag, size = 0x4, scoped, tag = 'scoped memory for tpu_custom_call.1']
    #allocation8 [shape = 'u8[512]{0}', space=smem, size = 0x200, scoped, tag = 'input window, operand 2, single buffered']
    #allocation9 [shape = 'u8[65536]{0}', space=vmem, size = 0x10000, scoped, tag = 'input window, operand 3, single buffered']
    #allocation10 [shape = 'u8[65536]{0}', space=vmem, size = 0x10000, scoped, tag = 'input window, operand 5, single buffered']
    #allocation11 [shape = 's32[1]{0}', space=sflag, size = 0x4, scoped, tag = 'scoped memory for tpu_custom_call.1']
    #allocation12 [shape = 'u8[65536]{0}', space=vmem, size = 0x10000, scoped, tag = 'input window, operand 7, single buffered']
    #allocation13 [shape = 'u8[65536]{0}', space=vmem, size = 0x10000, scoped, tag = 'input window, operand 9, single buffered']
    #allocation14 [shape = 's32[1]{0}', space=sflag, size = 0x4, scoped, tag = 'scoped memory for tpu_custom_call.1']
    #allocation15 [shape = 'u8[32768]{0}', space=vmem, size = 0x8000, scoped, tag = 'output window, operand 0, single buffered']
    %16 = vsyncpa [#allocation3], 0
    %17 = vsyncpa [#allocation7], 0
    %18 = vsyncpa [#allocation5], 0
    %19 = vsyncpa [#allocation11], 0
    %20 = vsyncpa [#allocation14], 0
    %21 = vsyncpa [#allocation4], 0
    // Predicated region
    $region2: #{tpu_custom_call.1} parent=1 // pred_check
      _
    $region3: #{tpu_custom_call.1} parent=1 // pred_check_branch
      %23 = sbr.rel (0) target = $region5
    $region4: #{tpu_custom_call.1} parent=1 // pred_region
      %25 = vsyncadd [#allocation3], 0
      %s26 = sshll.u32 %s0, 4
      %s27 = int_to_ptr.hbm [resolvable:$true] %s26
      %s28 = sshll.u32 [#allocation2], 4
      %s29 = int_to_ptr.vmem [resolvable:$true] %s28
      %34 = dma.hbm_to_vmem [thread:$0]  %s27, 512, %s29, [#allocation3], 64, 64, 4
    $region5: #{tpu_custom_call.1} parent=1 // pred_fallthru
      _
    // Predicated region
    $region6: #{tpu_custom_call.1} parent=1 // pred_check
      _
    $region7: #{tpu_custom_call.1} parent=1 // pred_check_branch
      %36 = sbr.rel (0) target = $region9
    $region8: #{tpu_custom_call.1} parent=1 // pred_region
      %38 = vsyncadd [#allocation7], 0
      %s39 = sshll.u32 %s1, 4
      %s40 = int_to_ptr.hbm [resolvable:$true] %s39
      %s41 = sshll.u32 [#allocation6], 4
      %s42 = int_to_ptr.vmem [resolvable:$true] %s41
      %47 = dma.hbm_to_vmem [thread:$0]  %s40, 512, %s42, [#allocation7], 64, 64, 4
    $region9: #{tpu_custom_call.1} parent=1 // pred_fallthru
      _
    // Predicated region
    $region10: #{tpu_custom_call.1} parent=1 // pred_check
      _
    $region11: #{tpu_custom_call.1} parent=1 // pred_check_branch
      %49 = sbr.rel (0) target = $region13
    $region12: #{tpu_custom_call.1} parent=1 // pred_region
      %51 = vsyncadd [#allocation5], 0
      %s53 = sshll.u32 %s2, 4
      %s54 = int_to_ptr.vmem [resolvable:$true] %s53
      %56 = dma.vmem_to_smem %s54, 16, [#allocation8], [#allocation5]
    $region13: #{tpu_custom_call.1} parent=1 // pred_fallthru
      _
    // Predicated region
    $region14: #{tpu_custom_call.1} parent=1 // pred_check
      _
    $region15: #{tpu_custom_call.1} parent=1 // pred_check_branch
      %58 = sbr.rel (0) target = $region17
    $region16: #{tpu_custom_call.1} parent=1 // pred_region
      %60 = vsyncadd [#allocation7], 0
      %s61 = sshll.u32 %s3, 4
      %s62 = int_to_ptr.hbm [resolvable:$true] %s61
      %s63 = sshll.u32 [#allocation9], 4
      %s64 = int_to_ptr.vmem [resolvable:$true] %s63
      %69 = dma.hbm_to_vmem [thread:$0]  %s62, 2048, %s64, [#allocation7], 128, 128, 8
    $region17: #{tpu_custom_call.1} parent=1 // pred_fallthru
      _
    // Predicated region
    $region18: #{tpu_custom_call.1} parent=1 // pred_check
      _
    $region19: #{tpu_custom_call.1} parent=1 // pred_check_branch
      %71 = sbr.rel (0) target = $region21
    $region20: #{tpu_custom_call.1} parent=1 // pred_region
      _
    $region21: #{tpu_custom_call.1} parent=1 // pred_fallthru
      _
    // Predicated region
    $region22: #{tpu_custom_call.1} parent=1 // pred_check
      _
    $region23: #{tpu_custom_call.1} parent=1 // pred_check_branch
      %73 = sbr.rel (0) target = $region25
    $region24: #{tpu_custom_call.1} parent=1 // pred_region
      %75 = vsyncadd [#allocation11], 0
      %s76 = sshll.u32 %s5, 4
      %s77 = int_to_ptr.hbm [resolvable:$true] %s76
      %s78 = sshll.u32 [#allocation10], 4
      %s79 = int_to_ptr.vmem [resolvable:$true] %s78
      %84 = dma.hbm_to_vmem [thread:$0]  %s77, 2048, %s79, [#allocation11], 128, 128, 8
    $region25: #{tpu_custom_call.1} parent=1 // pred_fallthru
      _
    // Predicated region
    $region26: #{tpu_custom_call.1} parent=1 // pred_check
      _
    $region27: #{tpu_custom_call.1} parent=1 // pred_check_branch
      %86 = sbr.rel (0) target = $region29
    $region28: #{tpu_custom_call.1} parent=1 // pred_region
      _
    $region29: #{tpu_custom_call.1} parent=1 // pred_fallthru
      _
    // Predicated region
    $region30: #{tpu_custom_call.1} parent=1 // pred_check
      _
    $region31: #{tpu_custom_call.1} parent=1 // pred_check_branch
      %88 = sbr.rel (0) target = $region33
    $region32: #{tpu_custom_call.1} parent=1 // pred_region
      %90 = vsyncadd [#allocation11], 0
      %s91 = sshll.u32 %s7, 4
      %s92 = int_to_ptr.hbm [resolvable:$true] %s91
      %s93 = sshll.u32 [#allocation12], 4
      %s94 = int_to_ptr.vmem [resolvable:$true] %s93
      %99 = dma.hbm_to_vmem [thread:$0]  %s92, 2048, %s94, [#allocation11], 128, 128, 8
    $region33: #{tpu_custom_call.1} parent=1 // pred_fallthru
      _
    // Predicated region
    $region34: #{tpu_custom_call.1} parent=1 // pred_check
      _
    $region35: #{tpu_custom_call.1} parent=1 // pred_check_branch
      %101 = sbr.rel (0) target = $region37
    $region36: #{tpu_custom_call.1} parent=1 // pred_region
      _
    $region37: #{tpu_custom_call.1} parent=1 // pred_fallthru
      _
    // Predicated region
    $region38: #{tpu_custom_call.1} parent=1 // pred_check
      _
    $region39: #{tpu_custom_call.1} parent=1 // pred_check_branch
      %103 = sbr.rel (0) target = $region41
    $region40: #{tpu_custom_call.1} parent=1 // pred_region
      %105 = vsyncadd [#allocation14], 0
      %s106 = sshll.u32 %s9, 4
      %s107 = int_to_ptr.hbm [resolvable:$true] %s106
      %s108 = sshll.u32 [#allocation13], 4
      %s109 = int_to_ptr.vmem [resolvable:$true] %s108
      %114 = dma.hbm_to_vmem [thread:$0]  %s107, 2048, %s109, [#allocation14], 128, 128, 8
    $region41: #{tpu_custom_call.1} parent=1 // pred_fallthru
      _
    // Predicated region
    $region42: #{tpu_custom_call.1} parent=1 // pred_check
      _
    $region43: #{tpu_custom_call.1} parent=1 // pred_check_branch
      %116 = sbr.rel (0) target = $region45
    $region44: #{tpu_custom_call.1} parent=1 // pred_region
      _
    $region45: #{tpu_custom_call.1} parent=1 // pred_fallthru
      _
    // Predicated region
    $region46: #{tpu_custom_call.1} parent=1 // pred_check
      _
    $region47: #{tpu_custom_call.1} parent=1 // pred_check_branch
      %118 = sbr.rel (0) target = $region49
    $region48: #{tpu_custom_call.1} parent=1 // pred_region
      %120 = dma.done [#allocation3], 512
    $region49: #{tpu_custom_call.1} parent=1 // pred_fallthru
      _
    // Predicated region
    $region50: #{tpu_custom_call.1} parent=1 // pred_check
      _
    $region51: #{tpu_custom_call.1} parent=1 // pred_check_branch
      %122 = sbr.rel (0) target = $region53
    $region52: #{tpu_custom_call.1} parent=1 // pred_region
      %124 = dma.done [#allocation7], 512
    $region53: #{tpu_custom_call.1} parent=1 // pred_fallthru
      _
    // Predicated region
    $region54: #{tpu_custom_call.1} parent=1 // pred_check
      _
    $region55: #{tpu_custom_call.1} parent=1 // pred_check_branch
      %126 = sbr.rel (0) target = $region57
    $region56: #{tpu_custom_call.1} parent=1 // pred_region
      %128 = dma.done [#allocation5], 16
    $region57: #{tpu_custom_call.1} parent=1 // pred_fallthru
      _
    // Predicated region
    $region58: #{tpu_custom_call.1} parent=1 // pred_check
      _
    $region59: #{tpu_custom_call.1} parent=1 // pred_check_branch
      %130 = sbr.rel (0) target = $region61
    $region60: #{tpu_custom_call.1} parent=1 // pred_region
      %132 = dma.done [#allocation7], 2048
    $region61: #{tpu_custom_call.1} parent=1 // pred_fallthru
      _
    // Predicated region
    $region62: #{tpu_custom_call.1} parent=1 // pred_check
      _
    $region63: #{tpu_custom_call.1} parent=1 // pred_check_branch
      %134 = sbr.rel (0) target = $region65
    $region64: #{tpu_custom_call.1} parent=1 // pred_region
      %136 = dma.done [#allocation11], 2048
    $region65: #{tpu_custom_call.1} parent=1 // pred_fallthru
      _
    // Predicated region
    $region66: #{tpu_custom_call.1} parent=1 // pred_check
      _
    $region67: #{tpu_custom_call.1} parent=1 // pred_check_branch
      %138 = sbr.rel (0) target = $region69
    $region68: #{tpu_custom_call.1} parent=1 // pred_region
      %140 = dma.done [#allocation11], 2048
    $region69: #{tpu_custom_call.1} parent=1 // pred_fallthru
      _
    // Predicated region
    $region70: #{tpu_custom_call.1} parent=1 // pred_check
      _
    $region71: #{tpu_custom_call.1} parent=1 // pred_check_branch
      %142 = sbr.rel (0) target = $region73
    $region72: #{tpu_custom_call.1} parent=1 // pred_region
      %144 = dma.done [#allocation14], 2048
    $region73: #{tpu_custom_call.1} parent=1 // pred_fallthru
      _
    %145 = sfence
    %v147 = vld [vmem:[#allocation6] sm:$0xf]
    %v148 = vld [vmem:[#allocation6 + $0x4] sm:$0xf]
    %v149 = vld [vmem:[#allocation6 + $0x8] sm:$0xf]
    %v150 = vld [vmem:[#allocation6 + $0xc] sm:$0xf]
    %v151 = vld [vmem:[#allocation6 + $0x10] sm:$0xf]
    %v152 = vld [vmem:[#allocation6 + $0x14] sm:$0xf]
    %v153 = vld [vmem:[#allocation6 + $0x18] sm:$0xf]
    %v154 = vld [vmem:[#allocation6 + $0x1c] sm:$0xf]
    %v155 = vld [vmem:[#allocation2] sm:$0xf]
    %v156 = vld [vmem:[#allocation2 + $0x4] sm:$0xf]
    %v157 = vld [vmem:[#allocation2 + $0x8] sm:$0xf]
    %v158 = vld [vmem:[#allocation2 + $0xc] sm:$0xf]
    %v159 = vld [vmem:[#allocation2 + $0x10] sm:$0xf]
    %v160 = vld [vmem:[#allocation2 + $0x14] sm:$0xf]
    %v161 = vld [vmem:[#allocation2 + $0x18] sm:$0xf]
    %v162 = vld [vmem:[#allocation2 + $0x1c] sm:$0xf]
    %s163 = sld [smem:[#allocation8]]
    %v164 = vld [vmem:[#allocation9] sm:$0xff]
    %v165 = vld [vmem:[#allocation9 + $0x8] sm:$0xff]
    %v166 = vld [vmem:[#allocation9 + $0x10] sm:$0xff]
    %v167 = vld [vmem:[#allocation9 + $0x18] sm:$0xff]
    %v168 = vld [vmem:[#allocation9 + $0x20] sm:$0xff]
    %v169 = vld [vmem:[#allocation9 + $0x28] sm:$0xff]
    %v170 = vld [vmem:[#allocation9 + $0x30] sm:$0xff]
    %v171 = vld [vmem:[#allocation9 + $0x38] sm:$0xff]
    %v172 = vld [vmem:[#allocation9 + $0x40] sm:$0xff]
    %v173 = vld [vmem:[#allocation9 + $0x48] sm:$0xff]
    %v174 = vld [vmem:[#allocation9 + $0x50] sm:$0xff]
    %v175 = vld [vmem:[#allocation9 + $0x58] sm:$0xff]
    %v176 = vld [vmem:[#allocation9 + $0x60] sm:$0xff]
    %v177 = vld [vmem:[#allocation9 + $0x68] sm:$0xff]
    %v178 = vld [vmem:[#allocation9 + $0x70] sm:$0xff]
    %v179 = vld [vmem:[#allocation9 + $0x78] sm:$0xff]
    %v180 = vld [vmem:[%s4] sm:$0x1]
    %v181 = vld [vmem:[#allocation10] sm:$0xff]
    %v182 = vld [vmem:[#allocation10 + $0x8] sm:$0xff]
    %v183 = vld [vmem:[#allocation10 + $0x10] sm:$0xff]
    %v184 = vld [vmem:[#allocation10 + $0x18] sm:$0xff]
    %v185 = vld [vmem:[#allocation10 + $0x20] sm:$0xff]
    %v186 = vld [vmem:[#allocation10 + $0x28] sm:$0xff]
    %v187 = vld [vmem:[#allocation10 + $0x30] sm:$0xff]
    %v188 = vld [vmem:[#allocation10 + $0x38] sm:$0xff]
    %v189 = vld [vmem:[#allocation10 + $0x40] sm:$0xff]
    %v190 = vld [vmem:[#allocation10 + $0x48] sm:$0xff]
    %v191 = vld [vmem:[#allocation10 + $0x50] sm:$0xff]
    %v192 = vld [vmem:[#allocation10 + $0x58] sm:$0xff]
    %v193 = vld [vmem:[#allocation10 + $0x60] sm:$0xff]
    %v194 = vld [vmem:[#allocation10 + $0x68] sm:$0xff]
    %v195 = vld [vmem:[#allocation10 + $0x70] sm:$0xff]
    %v196 = vld [vmem:[#allocation10 + $0x78] sm:$0xff]
    %v197 = vld [vmem:[%s6] sm:$0x1]
    %s198 = sadd.f32 %s163, 1.0
    %v199 = vunpack.c.l.bf16 %v155
    %v200 = vunpack.c.l.bf16 %v156
    %v201 = vunpack.c.l.bf16 %v157
    %v202 = vunpack.c.l.bf16 %v158
    %v203 = vunpack.c.l.bf16 %v159
    %v204 = vunpack.c.l.bf16 %v160
    %v205 = vunpack.c.l.bf16 %v161
    %v206 = vunpack.c.l.bf16 %v162
    %v207 = vstv %s198
    %v208 = vmul.f32 %v207, %v199
    %v209 = vmul.f32 %v207, %v200
    %v210 = vmul.f32 %v207, %v201
    %v211 = vmul.f32 %v207, %v202
    %v212 = vmul.f32 %v207, %v203
    %v213 = vmul.f32 %v207, %v204
    %v214 = vmul.f32 %v207, %v205
    %v215 = vmul.f32 %v207, %v206
    %v224 = vunpack.c.l.b16 %v147
    %v225 = vunpack.c.l.b16 %v148
    %v226 = vunpack.c.l.b16 %v149
    %v227 = vunpack.c.l.b16 %v150
    %v228 = vunpack.c.l.b16 %v151
    %v229 = vunpack.c.l.b16 %v152
    %v230 = vunpack.c.l.b16 %v153
    %v231 = vunpack.c.l.b16 %v154
    %v232 = vpack.c.b16 %v225, %v224
    %v233 = vpack.c.b16 %v227, %v226
    %v234 = vpack.c.b16 %v229, %v228
    %v235 = vpack.c.b16 %v231, %v230
    %v244 = vunpack.c.l.b16 %v155
    %v245 = vunpack.c.l.b16 %v156
    %v246 = vunpack.c.l.b16 %v157
    %v247 = vunpack.c.l.b16 %v158
    %v248 = vunpack.c.l.b16 %v159
    %v249 = vunpack.c.l.b16 %v160
    %v250 = vunpack.c.l.b16 %v161
    %v251 = vunpack.c.l.b16 %v162
    %v252 = vpack.c.b16 %v245, %v244
    %v253 = vpack.c.b16 %v247, %v246
    %v254 = vpack.c.b16 %v249, %v248
    %v255 = vpack.c.b16 %v251, %v250
    %vm260 = vcmask 523264
    %v262 = vsel %vm260, %v232, 0
    %v265 = vsel %vm260, %v233, 0
    %v268 = vsel %vm260, %v234, 0
    %v271 = vsel %vm260, %v235, 0
    %273 = vmatpush.bf16.msra.mxu0 0
    %274 = vmatpush.bf16.msra.mxu0 0
    %275 = vmatpush.bf16.msra.mxu0 0
    %276 = vmatpush.bf16.msra.mxu0 0
    %277 = vmatpush.bf16.msra.mxu0 %v255
    %278 = vmatpush.bf16.msra.mxu0 %v254
    %279 = vmatpush.bf16.msra.mxu0 %v253
    %280 = vmatpush.bf16.msra.mxu0 %v252
    %281 = vmatmul.bf16.gmra.mxu0 %v262
    %v282 = vpop.f32.mrf.mxu0
    %v283 = vadd.f32 %v208, %v282
    %v284 = vpop.f32.mrf.mxu0
    %v285 = vadd.f32 %v209, %v284
    %286 = vmatmul.bf16.gmra.mxu0 %v265
    %v287 = vpop.f32.mrf.mxu0
    %v288 = vadd.f32 %v210, %v287
    %v289 = vpop.f32.mrf.mxu0
    %v290 = vadd.f32 %v211, %v289
    %291 = vmatmul.bf16.gmra.mxu0 %v268
    %v292 = vpop.f32.mrf.mxu0
    %v293 = vadd.f32 %v212, %v292
    %v294 = vpop.f32.mrf.mxu0
    %v295 = vadd.f32 %v213, %v294
    %296 = vmatmul.bf16.gmra.mxu0 %v271
    %v297 = vpop.f32.mrf.mxu0
    %v298 = vadd.f32 %v214, %v297
    %v299 = vpop.f32.mrf.mxu0
    %v300 = vadd.f32 %v215, %v299
    %301 = vdwg.mxu0
    %v303 = vperm.slane %v180, 0
    %305 = vmatpush.msra.mxu0 %v179
    %306 = vmatpush.msra.mxu0 %v178
    %307 = vmatpush.msra.mxu0 %v177
    %308 = vmatpush.msra.mxu0 %v176
    %309 = vmatpush.msra.mxu0 %v175
    %310 = vmatpush.msra.mxu0 %v174
    %311 = vmatpush.msra.mxu0 %v173
    %312 = vmatpush.msra.mxu0 %v172
    %313 = vmatpush.msra.mxu0 %v171
    %314 = vmatpush.msra.mxu0 %v170
    %315 = vmatpush.msra.mxu0 %v169
    %316 = vmatpush.msra.mxu0 %v168
    %317 = vmatpush.msra.mxu0 %v167
    %318 = vmatpush.msra.mxu0 %v166
    %319 = vmatpush.msra.mxu0 %v165
    %320 = vmatpush.msra.mxu0 %v164
    %321 = vmatmul.f32.gmra.mxu0 %v283
    %v322 = vpop.f32.mrf.mxu0
    %v323 = vadd.f32 %v303, %v322
    %324 = vmatmul.f32.gmra.mxu0 %v285
    %v325 = vpop.f32.mrf.mxu0
    %v326 = vadd.f32 %v303, %v325
    %327 = vmatmul.f32.gmra.mxu0 %v288
    %v328 = vpop.f32.mrf.mxu0
    %v329 = vadd.f32 %v303, %v328
    %330 = vmatmul.f32.gmra.mxu0 %v290
    %v331 = vpop.f32.mrf.mxu0
    %v332 = vadd.f32 %v303, %v331
    %333 = vmatmul.f32.gmra.mxu0 %v293
    %v334 = vpop.f32.mrf.mxu0
    %v335 = vadd.f32 %v303, %v334
    %336 = vmatmul.f32.gmra.mxu0 %v295
    %v337 = vpop.f32.mrf.mxu0
    %v338 = vadd.f32 %v303, %v337
    %339 = vmatmul.f32.gmra.mxu0 %v298
    %v340 = vpop.f32.mrf.mxu0
    %v341 = vadd.f32 %v303, %v340
    %342 = vmatmul.f32.gmra.mxu0 %v300
    %v343 = vpop.f32.mrf.mxu0
    %v344 = vadd.f32 %v303, %v343
    %345 = vdwg.mxu0
    %v346 = vmax.f32 %v323, 0.0
    %v347 = vmax.f32 %v326, 0.0
    %v348 = vmax.f32 %v329, 0.0
    %v349 = vmax.f32 %v332, 0.0
    %v350 = vmax.f32 %v335, 0.0
    %v351 = vmax.f32 %v338, 0.0
    %v352 = vmax.f32 %v341, 0.0
    %v353 = vmax.f32 %v344, 0.0
    %v355 = vperm.slane %v197, 0
    %357 = vmatpush.msra.mxu0 %v196
    %358 = vmatpush.msra.mxu0 %v195
    %359 = vmatpush.msra.mxu0 %v194
    %360 = vmatpush.msra.mxu0 %v193
    %361 = vmatpush.msra.mxu0 %v192
    %362 = vmatpush.msra.mxu0 %v191
    %363 = vmatpush.msra.mxu0 %v190
    %364 = vmatpush.msra.mxu0 %v189
    %365 = vmatpush.msra.mxu0 %v188
    %366 = vmatpush.msra.mxu0 %v187
    %367 = vmatpush.msra.mxu0 %v186
    %368 = vmatpush.msra.mxu0 %v185
    %369 = vmatpush.msra.mxu0 %v184
    %370 = vmatpush.msra.mxu0 %v183
    %371 = vmatpush.msra.mxu0 %v182
    %372 = vmatpush.msra.mxu0 %v181
    %373 = vmatmul.f32.gmra.mxu0 %v346
    %v374 = vpop.f32.mrf.mxu0
    %v375 = vadd.f32 %v355, %v374
    %376 = vmatmul.f32.gmra.mxu0 %v347
    %v377 = vpop.f32.mrf.mxu0
    %v378 = vadd.f32 %v355, %v377
    %379 = vmatmul.f32.gmra.mxu0 %v348
    %v380 = vpop.f32.mrf.mxu0
    %v381 = vadd.f32 %v355, %v380
    %382 = vmatmul.f32.gmra.mxu0 %v349
    %v383 = vpop.f32.mrf.mxu0
    %v384 = vadd.f32 %v355, %v383
    %385 = vmatmul.f32.gmra.mxu0 %v350
    %v386 = vpop.f32.mrf.mxu0
    %v387 = vadd.f32 %v355, %v386
    %388 = vmatmul.f32.gmra.mxu0 %v351
    %v389 = vpop.f32.mrf.mxu0
    %v390 = vadd.f32 %v355, %v389
    %391 = vmatmul.f32.gmra.mxu0 %v352
    %v392 = vpop.f32.mrf.mxu0
    %v393 = vadd.f32 %v355, %v392
    %394 = vmatmul.f32.gmra.mxu0 %v353
    %v395 = vpop.f32.mrf.mxu0
    %v396 = vadd.f32 %v355, %v395
    %397 = vdwg.mxu0
    %v398 = vmax.f32 %v375, 0.0
    %v399 = vmax.f32 %v378, 0.0
    %v400 = vmax.f32 %v381, 0.0
    %v401 = vmax.f32 %v384, 0.0
    %v402 = vmax.f32 %v387, 0.0
    %v403 = vmax.f32 %v390, 0.0
    %v404 = vmax.f32 %v393, 0.0
    %v405 = vmax.f32 %v396, 0.0
    %v406 = vpack.c.bf16 %v398, %v398
    %v407 = vpack.c.bf16 %v399, %v399
    %v408 = vpack.c.bf16 %v400, %v400
    %v409 = vpack.c.bf16 %v401, %v401
    %v410 = vpack.c.bf16 %v402, %v402
    %v411 = vpack.c.bf16 %v403, %v403
    %v412 = vpack.c.bf16 %v404, %v404
    %v413 = vpack.c.bf16 %v405, %v405
    %s414 = sld [smem:[#allocation8 + $0x1]]
    %v415 = vld [vmem:[#allocation12] sm:$0xff]
    %v416 = vld [vmem:[#allocation12 + $0x8] sm:$0xff]
    %v417 = vld [vmem:[#allocation12 + $0x10] sm:$0xff]
    %v418 = vld [vmem:[#allocation12 + $0x18] sm:$0xff]
    %v419 = vld [vmem:[#allocation12 + $0x20] sm:$0xff]
    %v420 = vld [vmem:[#allocation12 + $0x28] sm:$0xff]
    %v421 = vld [vmem:[#allocation12 + $0x30] sm:$0xff]
    %v422 = vld [vmem:[#allocation12 + $0x38] sm:$0xff]
    %v423 = vld [vmem:[#allocation12 + $0x40] sm:$0xff]
    %v424 = vld [vmem:[#allocation12 + $0x48] sm:$0xff]
    %v425 = vld [vmem:[#allocation12 + $0x50] sm:$0xff]
    %v426 = vld [vmem:[#allocation12 + $0x58] sm:$0xff]
    %v427 = vld [vmem:[#allocation12 + $0x60] sm:$0xff]
    %v428 = vld [vmem:[#allocation12 + $0x68] sm:$0xff]
    %v429 = vld [vmem:[#allocation12 + $0x70] sm:$0xff]
    %v430 = vld [vmem:[#allocation12 + $0x78] sm:$0xff]
    %v431 = vld [vmem:[%s8] sm:$0x1]
    %v432 = vld [vmem:[#allocation13] sm:$0xff]
    %v433 = vld [vmem:[#allocation13 + $0x8] sm:$0xff]
    %v434 = vld [vmem:[#allocation13 + $0x10] sm:$0xff]
    %v435 = vld [vmem:[#allocation13 + $0x18] sm:$0xff]
    %v436 = vld [vmem:[#allocation13 + $0x20] sm:$0xff]
    %v437 = vld [vmem:[#allocation13 + $0x28] sm:$0xff]
    %v438 = vld [vmem:[#allocation13 + $0x30] sm:$0xff]
    %v439 = vld [vmem:[#allocation13 + $0x38] sm:$0xff]
    %v440 = vld [vmem:[#allocation13 + $0x40] sm:$0xff]
    %v441 = vld [vmem:[#allocation13 + $0x48] sm:$0xff]
    %v442 = vld [vmem:[#allocation13 + $0x50] sm:$0xff]
    %v443 = vld [vmem:[#allocation13 + $0x58] sm:$0xff]
    %v444 = vld [vmem:[#allocation13 + $0x60] sm:$0xff]
    %v445 = vld [vmem:[#allocation13 + $0x68] sm:$0xff]
    %v446 = vld [vmem:[#allocation13 + $0x70] sm:$0xff]
    %v447 = vld [vmem:[#allocation13 + $0x78] sm:$0xff]
    %v448 = vld [vmem:[%s10] sm:$0x1]
    %s449 = sadd.f32 %s414, 1.0
    %v450 = vunpack.c.l.bf16 %v406
    %v451 = vunpack.c.l.bf16 %v407
    %v452 = vunpack.c.l.bf16 %v408
    %v453 = vunpack.c.l.bf16 %v409
    %v454 = vunpack.c.l.bf16 %v410
    %v455 = vunpack.c.l.bf16 %v411
    %v456 = vunpack.c.l.bf16 %v412
    %v457 = vunpack.c.l.bf16 %v413
    %v458 = vstv %s449
    %v459 = vmul.f32 %v458, %v450
    %v460 = vmul.f32 %v458, %v451
    %v461 = vmul.f32 %v458, %v452
    %v462 = vmul.f32 %v458, %v453
    %v463 = vmul.f32 %v458, %v454
    %v464 = vmul.f32 %v458, %v455
    %v465 = vmul.f32 %v458, %v456
    %v466 = vmul.f32 %v458, %v457
    %v475 = vunpack.c.l.b16 %v406
    %v476 = vunpack.c.l.b16 %v407
    %v477 = vunpack.c.l.b16 %v408
    %v478 = vunpack.c.l.b16 %v409
    %v479 = vunpack.c.l.b16 %v410
    %v480 = vunpack.c.l.b16 %v411
    %v481 = vunpack.c.l.b16 %v412
    %v482 = vunpack.c.l.b16 %v413
    %v483 = vpack.c.b16 %v476, %v475
    %v484 = vpack.c.b16 %v478, %v477
    %v485 = vpack.c.b16 %v480, %v479
    %v486 = vpack.c.b16 %v482, %v481
    %491 = vmatpush.bf16.msra.mxu0 0
    %492 = vmatpush.bf16.msra.mxu0 0
    %493 = vmatpush.bf16.msra.mxu0 0
    %494 = vmatpush.bf16.msra.mxu0 0
    %495 = vmatpush.bf16.msra.mxu0 %v486
    %496 = vmatpush.bf16.msra.mxu0 %v485
    %497 = vmatpush.bf16.msra.mxu0 %v484
    %498 = vmatpush.bf16.msra.mxu0 %v483
    %499 = vmatmul.bf16.gmra.mxu0 %v262
    %v500 = vpop.f32.mrf.mxu0
    %v501 = vadd.f32 %v459, %v500
    %v502 = vpop.f32.mrf.mxu0
    %v503 = vadd.f32 %v460, %v502
    %504 = vmatmul.bf16.gmra.mxu0 %v265
    %v505 = vpop.f32.mrf.mxu0
    %v506 = vadd.f32 %v461, %v505
    %v507 = vpop.f32.mrf.mxu0
    %v508 = vadd.f32 %v462, %v507
    %509 = vmatmul.bf16.gmra.mxu0 %v268
    %v510 = vpop.f32.mrf.mxu0
    %v511 = vadd.f32 %v463, %v510
    %v512 = vpop.f32.mrf.mxu0
    %v513 = vadd.f32 %v464, %v512
    %514 = vmatmul.bf16.gmra.mxu0 %v271
    %v515 = vpop.f32.mrf.mxu0
    %v516 = vadd.f32 %v465, %v515
    %v517 = vpop.f32.mrf.mxu0
    %v518 = vadd.f32 %v466, %v517
    %519 = vdwg.mxu0
    %v521 = vperm.slane %v431, 0
    %523 = vmatpush.msra.mxu0 %v430
    %524 = vmatpush.msra.mxu0 %v429
    %525 = vmatpush.msra.mxu0 %v428
    %526 = vmatpush.msra.mxu0 %v427
    %527 = vmatpush.msra.mxu0 %v426
    %528 = vmatpush.msra.mxu0 %v425
    %529 = vmatpush.msra.mxu0 %v424
    %530 = vmatpush.msra.mxu0 %v423
    %531 = vmatpush.msra.mxu0 %v422
    %532 = vmatpush.msra.mxu0 %v421
    %533 = vmatpush.msra.mxu0 %v420
    %534 = vmatpush.msra.mxu0 %v419
    %535 = vmatpush.msra.mxu0 %v418
    %536 = vmatpush.msra.mxu0 %v417
    %537 = vmatpush.msra.mxu0 %v416
    %538 = vmatpush.msra.mxu0 %v415
    %539 = vmatmul.f32.gmra.mxu0 %v501
    %v540 = vpop.f32.mrf.mxu0
    %v541 = vadd.f32 %v521, %v540
    %542 = vmatmul.f32.gmra.mxu0 %v503
    %v543 = vpop.f32.mrf.mxu0
    %v544 = vadd.f32 %v521, %v543
    %545 = vmatmul.f32.gmra.mxu0 %v506
    %v546 = vpop.f32.mrf.mxu0
    %v547 = vadd.f32 %v521, %v546
    %548 = vmatmul.f32.gmra.mxu0 %v508
    %v549 = vpop.f32.mrf.mxu0
    %v550 = vadd.f32 %v521, %v549
    %551 = vmatmul.f32.gmra.mxu0 %v511
    %v552 = vpop.f32.mrf.mxu0
    %v553 = vadd.f32 %v521, %v552
    %554 = vmatmul.f32.gmra.mxu0 %v513
    %v555 = vpop.f32.mrf.mxu0
    %v556 = vadd.f32 %v521, %v555
    %557 = vmatmul.f32.gmra.mxu0 %v516
    %v558 = vpop.f32.mrf.mxu0
    %v559 = vadd.f32 %v521, %v558
    %560 = vmatmul.f32.gmra.mxu0 %v518
    %v561 = vpop.f32.mrf.mxu0
    %v562 = vadd.f32 %v521, %v561
    %563 = vdwg.mxu0
    %v564 = vmax.f32 %v541, 0.0
    %v565 = vmax.f32 %v544, 0.0
    %v566 = vmax.f32 %v547, 0.0
    %v567 = vmax.f32 %v550, 0.0
    %v568 = vmax.f32 %v553, 0.0
    %v569 = vmax.f32 %v556, 0.0
    %v570 = vmax.f32 %v559, 0.0
    %v571 = vmax.f32 %v562, 0.0
    %v573 = vperm.slane %v448, 0
    %575 = vmatpush.msra.mxu0 %v447
    %576 = vmatpush.msra.mxu0 %v446
    %577 = vmatpush.msra.mxu0 %v445
    %578 = vmatpush.msra.mxu0 %v444
    %579 = vmatpush.msra.mxu0 %v443
    %580 = vmatpush.msra.mxu0 %v442
    %581 = vmatpush.msra.mxu0 %v441
    %582 = vmatpush.msra.mxu0 %v440
    %583 = vmatpush.msra.mxu0 %v439
    %584 = vmatpush.msra.mxu0 %v438
    %585 = vmatpush.msra.mxu0 %v437
    %586 = vmatpush.msra.mxu0 %v436
    %587 = vmatpush.msra.mxu0 %v435
    %588 = vmatpush.msra.mxu0 %v434
    %589 = vmatpush.msra.mxu0 %v433
    %590 = vmatpush.msra.mxu0 %v432
    %591 = vmatmul.f32.gmra.mxu0 %v564
    %v592 = vpop.f32.mrf.mxu0
    %v593 = vadd.f32 %v573, %v592
    %594 = vmatmul.f32.gmra.mxu0 %v565
    %v595 = vpop.f32.mrf.mxu0
    %v596 = vadd.f32 %v573, %v595
    %597 = vmatmul.f32.gmra.mxu0 %v566
    %v598 = vpop.f32.mrf.mxu0
    %v599 = vadd.f32 %v573, %v598
    %600 = vmatmul.f32.gmra.mxu0 %v567
    %v601 = vpop.f32.mrf.mxu0
    %v602 = vadd.f32 %v573, %v601
    %603 = vmatmul.f32.gmra.mxu0 %v568
    %v604 = vpop.f32.mrf.mxu0
    %v605 = vadd.f32 %v573, %v604
    %606 = vmatmul.f32.gmra.mxu0 %v569
    %v607 = vpop.f32.mrf.mxu0
    %v608 = vadd.f32 %v573, %v607
    %609 = vmatmul.f32.gmra.mxu0 %v570
    %v610 = vpop.f32.mrf.mxu0
    %v611 = vadd.f32 %v573, %v610
    %612 = vmatmul.f32.gmra.mxu0 %v571
    %v613 = vpop.f32.mrf.mxu0
    %v614 = vadd.f32 %v573, %v613
    %615 = vdwg.mxu0
    %616 = vmax.xlane.f32.xlu0 %v593
    %v617 = vpop.xlane.xlu0 %616
    %618 = vmax.xlane.f32.xlu0 %v596
    %v619 = vpop.xlane.xlu0 %618
    %620 = vmax.xlane.f32.xlu0 %v599
    %v621 = vpop.xlane.xlu0 %620
    %622 = vmax.xlane.f32.xlu0 %v602
    %v623 = vpop.xlane.xlu0 %622
    %624 = vmax.xlane.f32.xlu0 %v605
    %v625 = vpop.xlane.xlu0 %624
    %626 = vmax.xlane.f32.xlu0 %v608
    %v627 = vpop.xlane.xlu0 %626
    %628 = vmax.xlane.f32.xlu0 %v611
    %v629 = vpop.xlane.xlu0 %628
    %630 = vmax.xlane.f32.xlu0 %v614
    %v631 = vpop.xlane.xlu0 %630
    %v632 = vsub.f32 %v593, %v617
    %v633 = vsub.f32 %v596, %v619
    %v634 = vsub.f32 %v599, %v621
    %v635 = vsub.f32 %v602, %v623
    %v636 = vsub.f32 %v605, %v625
    %v637 = vsub.f32 %v608, %v627
    %v638 = vsub.f32 %v611, %v629
    %v639 = vsub.f32 %v614, %v631
    %v640 = vmul.f32 %v632, 1.442695
    %v641 = vpow.pop %v640
    %v642 = vmul.f32 %v633, 1.442695
    %v643 = vpow.pop %v642
    %v644 = vmul.f32 %v634, 1.442695
    %v645 = vpow.pop %v644
    %v646 = vmul.f32 %v635, 1.442695
    %v647 = vpow.pop %v646
    %v648 = vmul.f32 %v636, 1.442695
    %v649 = vpow.pop %v648
    %v650 = vmul.f32 %v637, 1.442695
    %v651 = vpow.pop %v650
    %v652 = vmul.f32 %v638, 1.442695
    %v653 = vpow.pop %v652
    %v654 = vmul.f32 %v639, 1.442695
    %v655 = vpow.pop %v654
    %656 = vadd.xlane.f32.xlu0 %v641
    %v657 = vpop.xlane.xlu0 %656
    %658 = vadd.xlane.f32.xlu0 %v643
    %v659 = vpop.xlane.xlu0 %658
    %660 = vadd.xlane.f32.xlu0 %v645
    %v661 = vpop.xlane.xlu0 %660
    %662 = vadd.xlane.f32.xlu0 %v647
    %v663 = vpop.xlane.xlu0 %662
    %664 = vadd.xlane.f32.xlu0 %v649
    %v665 = vpop.xlane.xlu0 %664
    %666 = vadd.xlane.f32.xlu0 %v651
    %v667 = vpop.xlane.xlu0 %666
    %668 = vadd.xlane.f32.xlu0 %v653
    %v669 = vpop.xlane.xlu0 %668
    %670 = vadd.xlane.f32.xlu0 %v655
    %v671 = vpop.xlane.xlu0 %670
    %v672 = vlog2.pop %v657
    %v673 = vmul.f32 %v672, 0.6931472
    %v674 = vlog2.pop %v659
    %v675 = vmul.f32 %v674, 0.6931472
    %v676 = vlog2.pop %v661
    %v677 = vmul.f32 %v676, 0.6931472
    %v678 = vlog2.pop %v663
    %v679 = vmul.f32 %v678, 0.6931472
    %v680 = vlog2.pop %v665
    %v681 = vmul.f32 %v680, 0.6931472
    %v682 = vlog2.pop %v667
    %v683 = vmul.f32 %v682, 0.6931472
    %v684 = vlog2.pop %v669
    %v685 = vmul.f32 %v684, 0.6931472
    %v686 = vlog2.pop %v671
    %v687 = vmul.f32 %v686, 0.6931472
    %v688 = vsub.f32 %v632, %v673
    %v689 = vsub.f32 %v633, %v675
    %v690 = vsub.f32 %v634, %v677
    %v691 = vsub.f32 %v635, %v679
    %v692 = vsub.f32 %v636, %v681
    %v693 = vsub.f32 %v637, %v683
    %v694 = vsub.f32 %v638, %v685
    %v695 = vsub.f32 %v639, %v687
    %696 = vst [vmem:[#allocation15] sm:$0xff] %v688
    %697 = vst [vmem:[#allocation15 + $0x8] sm:$0xff] %v689
    %698 = vst [vmem:[#allocation15 + $0x10] sm:$0xff] %v690
    %699 = vst [vmem:[#allocation15 + $0x18] sm:$0xff] %v691
    %700 = vst [vmem:[#allocation15 + $0x20] sm:$0xff] %v692
    %701 = vst [vmem:[#allocation15 + $0x28] sm:$0xff] %v693
    %702 = vst [vmem:[#allocation15 + $0x30] sm:$0xff] %v694
    %703 = vst [vmem:[#allocation15 + $0x38] sm:$0xff] %v695
    // Predicated region
    $region74: #{tpu_custom_call.1} parent=1 // pred_check
      _
    $region75: #{tpu_custom_call.1} parent=1 // pred_check_branch
      %705 = sbr.rel (0) target = $region77
    $region76: #{tpu_custom_call.1} parent=1 // pred_region
      %707 = vsyncadd [#allocation4], 0
      %s708 = sshll.u32 [#allocation15], 4
      %s709 = int_to_ptr.vmem [resolvable:$true] %s708
      %s710 = sshll.u32 %s11, 4
      %s711 = int_to_ptr.hbm [resolvable:$true] %s710
      %716 = dma.vmem_to_hbm [thread:$0]  %s709, 1024, %s711, [#allocation4], 128, 128, 8
    $region77: #{tpu_custom_call.1} parent=1 // pred_fallthru
      _
    // Predicated region
    $region78: #{tpu_custom_call.1} parent=1 // pred_check
      _
    $region79: #{tpu_custom_call.1} parent=1 // pred_check_branch
      %718 = sbr.rel (0) target = $region81
    $region80: #{tpu_custom_call.1} parent=1 // pred_region
      %720 = dma.done [#allocation4], 1024
    $region81: #{tpu_custom_call.1} parent=1 // pred_fallthru
      _
    %721 = vsyncpa [#allocation3], 1
    %722 = vsyncpa [#allocation7], 1
    %723 = vsyncpa [#allocation11], 1
    %724 = vsyncpa [#allocation14], 1
    %725 = vsyncpa [#allocation4], 1
    %726 = vsyncpa [#allocation5], 1

</llo_original>
